<compile_context>
chip_gen: v7x
topology: tpu7x:2x2x1
jax: 0.10.0
libtpu: 0.0.40
codegen_flags: <defaults>
</compile_context>

<pallas_src>
import functools

import jax
import jax.numpy as jnp
from jax.experimental import pallas as pl
from jax.experimental.pallas import tpu as pltpu


def _round_up(n: int, m: int) -> int:
    return ((n + m - 1) // m) * m


def _interp_matrix(skip_size: int, output_size: int) -> jnp.ndarray:
    """W such that row @ W == F.interpolate(row[None, None], output_size,
    mode='linear', align_corners=True)."""
    j = jnp.arange(output_size, dtype=jnp.float32)
    if output_size > 1:
        pos = j * (skip_size - 1) / (output_size - 1)
    else:
        pos = jnp.zeros((1,), dtype=jnp.float32)
    lo = jnp.floor(pos).astype(jnp.int32)
    hi = jnp.minimum(lo + 1, skip_size - 1)
    frac = pos - lo.astype(jnp.float32)
    cols = jnp.arange(output_size)
    W = jnp.zeros((skip_size, output_size), dtype=jnp.float32)
    W = W.at[lo, cols].add(1.0 - frac)
    W = W.at[hi, cols].add(frac)
    return W


def _addnorm_kernel(*refs, resample: bool, eps: float, inv_d: float):
    if resample:
        x_ref, skip_ref, w_ref, gamma_ref, beta_ref, o_ref = refs
    else:
        x_ref, skip_ref, gate_ref, gamma_ref, beta_ref, o_ref = refs

    x = x_ref[...].astype(jnp.float32)                            # (R, D)
    if resample:
        # TimeDistributedInterpolation (linear, align_corners=True) with the
        # AddNorm gate folded into the matrix: skip @ (W * gate) on the MXU.
        s = jnp.dot(skip_ref[...], w_ref[...],
                    preferred_element_type=jnp.float32)           # (R, D)
    else:
        s = skip_ref[...].astype(jnp.float32) * gate_ref[...]     # gate = 2*sigmoid(mask)
    y = x + s

    # Two-pass LayerNorm statistics over the feature (lane) axis.
    mean = jnp.sum(y, axis=-1, keepdims=True) * inv_d
    c = y - mean
    var = jnp.sum(c * c, axis=-1, keepdims=True) * inv_d          # biased variance
    yn = c * jax.lax.rsqrt(var + eps)
    o_ref[...] = (yn * gamma_ref[...] + beta_ref[...]).astype(o_ref.dtype)


def add_norm(x, skip, mask, gamma, beta, *, eps: float = 1e-5, block_rows=None):
    """x: (B, T, D); skip: (B, T, Ds); mask/gamma/beta: (D,). Returns (B, T, D)."""
    B, T, D = x.shape
    Ds = skip.shape[-1]
    resample = (Ds != D)
    N = B * T
    out_dtype = x.dtype

    # ---- flatten (no padding passes; blocks use the full feature dim) ---------------
    x2 = x.reshape(N, D)
    s2 = skip.reshape(N, Ds)

    # Tiny-N safety only: the sublane block dim must be a multiple of 8.
    N_eff = N
    if N < 8:
        x2 = jnp.pad(x2, ((0, 8 - N), (0, 0)))
        s2 = jnp.pad(s2, ((0, 8 - N), (0, 0)))
        N_eff = 8

    # ---- parameters (gate precomputed once; folded into W when resampling) ----------
    gate = 2.0 * jax.nn.sigmoid(mask.astype(jnp.float32))          # (D,)
    gamma2 = gamma.astype(jnp.float32).reshape(1, D)
    beta2 = beta.astype(jnp.float32).reshape(1, D)

    if resample:
        W_gated = _interp_matrix(Ds, D) * gate[None, :]            # (Ds, D), f32
        if skip.dtype == jnp.bfloat16:
            W_gated = W_gated.astype(jnp.bfloat16)                 # single-pass MXU on v7x
        w_itemsize = W_gated.dtype.itemsize
    else:
        gate2 = gate.reshape(1, D)

    # ---- VMEM-aware row-tile sizing (v7x: 64 MiB/TC physical) -----------------------
    try:
        vmem_cap = int(pltpu.get_tpu_info().vmem_capacity_bytes)
    except Exception:
        vmem_cap = 64 << 20                         # conservative (v7x per-TC)
    vmem_limit = max(4 << 20, min(40 << 20, (vmem_cap * 3) // 4))

    itemsize = x.dtype.itemsize
    per_row_bytes = (D * itemsize                    # x tile
                     + Ds * skip.dtype.itemsize      # skip tile
                     + D * itemsize)                 # out tile
    fixed_bytes = 3 * D * 4 * 2                      # gate/gamma/beta, double-buffered
    if resample:
        fixed_bytes += Ds * D * w_itemsize * 2       # interp matrix, double-buffered
    tile_budget = max(0, vmem_limit - fixed_bytes) * 2 // 3

    if block_rows is None:
        block_rows = tile_budget // (2 * per_row_bytes)            # double-buffered tiles
        block_rows = max(8, min(1024, (block_rows // 8) * 8))
        # Keep >= ~4 grid steps so both v7x TensorCores stay busy (harmless on 1-TC chips).
        rows_cap = max(8, _round_up(-(-N_eff // 4), 8))
        block_rows = min(block_rows, rows_cap)
    assert block_rows % 8 == 0

    grid = pl.cdiv(N_eff, block_rows)                # ragged last block is fine (per-row op)

    # ---- specs ----------------------------------------------------------------------
    args = [x2, s2]
    in_specs = [
        pl.BlockSpec((block_rows, D), lambda i: (i, 0)),           # x rows
        pl.BlockSpec((block_rows, Ds), lambda i: (i, 0)),          # skip rows
    ]
    if resample:
        args.append(W_gated)
        in_specs.append(pl.BlockSpec((Ds, D), lambda i: (0, 0)))   # gated interp matrix
    else:
        args.append(gate2)
        in_specs.append(pl.BlockSpec((1, D), lambda i: (0, 0)))    # gate
    args += [gamma2, beta2]
    in_specs += [
        pl.BlockSpec((1, D), lambda i: (0, 0)),                    # LN gamma
        pl.BlockSpec((1, D), lambda i: (0, 0)),                    # LN beta
    ]

    bytes_accessed = (N_eff * D * itemsize
                      + N_eff * Ds * skip.dtype.itemsize
                      + N_eff * D * itemsize)
    flops = (2 * N_eff * Ds * D) if resample else (8 * N_eff * D)
    cost = pl.CostEstimate(flops=int(flops), transcendentals=0,
                           bytes_accessed=int(bytes_accessed))

    kernel = functools.partial(_addnorm_kernel, resample=resample, eps=eps,
                               inv_d=1.0 / D)

    out = pl.pallas_call(
        kernel,
        out_shape=jax.ShapeDtypeStruct((N_eff, D), out_dtype),
        grid_spec=pltpu.PrefetchScalarGridSpec(
            num_scalar_prefetch=0,
            grid=(grid,),
            in_specs=in_specs,
            out_specs=pl.BlockSpec((block_rows, D), lambda i: (i, 0)),
        ),
        compiler_params=pltpu.CompilerParams(
            dimension_semantics=("parallel",),
            vmem_limit_bytes=int(vmem_limit)),
        cost_estimate=cost,
    )(*args)

    if N_eff != N:
        out = out[:N]
    return out.reshape(B, T, D)


def _reference(x, skip, mask, gamma, beta, eps=1e-5):
    x = x.astype(jnp.float32)
    skip = skip.astype(jnp.float32)
    D = x.shape[-1]
    if skip.shape[-1] != D:
        W = _interp_matrix(skip.shape[-1], D)
        skip = jnp.einsum("bts,sd->btd", skip, W,
                          precision=jax.lax.Precision.HIGHEST)
    skip = skip * jax.nn.sigmoid(mask) * 2.0
    y = x + skip
    mean = jnp.mean(y, axis=-1, keepdims=True)
    var = jnp.mean((y - mean) ** 2, axis=-1, keepdims=True)
    return (y - mean) / jnp.sqrt(var + eps) * gamma + beta


if __name__ == "__main__":
    key = jax.random.PRNGKey(0)
    B, T, D, D_skip = 2, 8, 32, 16

    k1, k2, k3, k4, k5, k6, k7 = jax.random.split(key, 7)
    x = jax.random.normal(k1, (B, T, D), dtype=jnp.float32)
    skip_same = jax.random.normal(k2, (B, T, D), dtype=jnp.float32)
    skip_small = jax.random.normal(k3, (B, T, D_skip), dtype=jnp.float32)

    # Deterministic "parameters" (module __init__: mask zeros, LN weight ones,
    # bias zeros; perturbed deterministically here so the math is exercised).
    mask = 0.1 * jnp.arange(D, dtype=jnp.float32)          # gate input
    gamma = 1.0 + 0.01 * jnp.arange(D, dtype=jnp.float32)  # LayerNorm weight
    beta = 0.05 * jnp.arange(D, dtype=jnp.float32)         # LayerNorm bias

    # Case 1: skip_size == input_size (no resample), f32.
    out1 = jax.block_until_ready(add_norm(x, skip_same, mask, gamma, beta))
    ref1 = _reference(x, skip_same, mask, gamma, beta)
    assert jnp.allclose(out1, ref1, atol=2e-4, rtol=2e-4)

    # Case 2: skip_size != input_size (TimeDistributedInterpolation resample), f32.
    out2 = jax.block_until_ready(add_norm(x, skip_small, mask, gamma, beta))
    ref2 = _reference(x, skip_small, mask, gamma, beta)
    assert jnp.allclose(out2, ref2, atol=2e-4, rtol=2e-4)

    # Case 3: feature dim not a multiple of 128 and a ragged grid
    # (B*T = 15 with block_rows = 8 -> partial last block), with resample.
    B3, T3, D3, Ds3 = 3, 5, 120, 48
    x3 = jax.random.normal(k4, (B3, T3, D3), dtype=jnp.float32)
    skip3 = jax.random.normal(k5, (B3, T3, Ds3), dtype=jnp.float32)
    mask3 = 0.05 * jnp.arange(D3, dtype=jnp.float32)
    gamma3 = 1.0 + 0.005 * jnp.arange(D3, dtype=jnp.float32)
    beta3 = 0.02 * jnp.arange(D3, dtype=jnp.float32)
    out3 = jax.block_until_ready(add_norm(x3, skip3, mask3, gamma3, beta3))
    ref3 = _reference(x3, skip3, mask3, gamma3, beta3)
    assert jnp.allclose(out3, ref3, atol=2e-4, rtol=2e-4)

    # Case 4: bf16 inputs/outputs end-to-end (f32 math inside the kernel).
    x_bf = x.astype(jnp.bfloat16)
    s_bf = skip_same.astype(jnp.bfloat16)
    out4 = jax.block_until_ready(add_norm(x_bf, s_bf, mask, gamma, beta))
    ref4 = _reference(x_bf, s_bf, mask, gamma, beta)
    assert out4.dtype == jnp.bfloat16
    assert jnp.allclose(out4.astype(jnp.float32), ref4, atol=6e-2, rtol=6e-2)

    # Case 5: bf16 with resample (gated interp matrix carried in bf16).
    x5 = jax.random.normal(k6, (B, T, D), dtype=jnp.bfloat16)
    s5 = jax.random.normal(k7, (B, T, D_skip), dtype=jnp.bfloat16)
    out5 = jax.block_until_ready(add_norm(x5, s5, mask, gamma, beta))
    ref5 = _reference(x5, s5, mask, gamma, beta)
    assert out5.dtype == jnp.bfloat16
    assert jnp.allclose(out5.astype(jnp.float32), ref5, atol=1e-1, rtol=1e-1)

    print("KERNEL_OK")
</pallas_src>

<mosaic_0001>
module attributes {stable_mosaic.version = 11 : i64} {
  func.func @_addnorm_kernel(%arg0: i32, %arg1: memref<8x32xf32, #tpu.memory_space<vmem>>, %arg2: memref<8x32xf32, #tpu.memory_space<vmem>>, %arg3: memref<1x32xf32, #tpu.memory_space<vmem>>, %arg4: memref<1x32xf32, #tpu.memory_space<vmem>>, %arg5: memref<1x32xf32, #tpu.memory_space<vmem>>, %arg6: memref<8x32xf32, #tpu.memory_space<vmem>>) attributes {dimension_semantics = [#tpu.dimension_semantics<parallel>], iteration_bounds = array<i64: 2>, scalar_prefetch = 0 : i64, scratch_operands = 0 : i64, tpu.core_type = #tpu.core_type<tc>, window_params = [{transform_indices = @transform_0, window_bounds = array<i64: 8, 32>}, {transform_indices = @transform_1, window_bounds = array<i64: 8, 32>}, {pipeline_mode = #tpu.pipeline_mode<synchronous>, transform_indices = @transform_2, window_bounds = array<i64: 1, 32>}, {pipeline_mode = #tpu.pipeline_mode<synchronous>, transform_indices = @transform_3, window_bounds = array<i64: 1, 32>}, {pipeline_mode = #tpu.pipeline_mode<synchronous>, transform_indices = @transform_4, window_bounds = array<i64: 1, 32>}, {transform_indices = @transform_5, window_bounds = array<i64: 8, 32>}]} {
    %c0 = arith.constant 0 : index
    %c0_0 = arith.constant 0 : index
    %0 = vector.load %arg1[%c0, %c0_0] : memref<8x32xf32, #tpu.memory_space<vmem>>, vector<8x32xf32>
    %c0_1 = arith.constant 0 : index
    %c0_2 = arith.constant 0 : index
    %1 = vector.load %arg2[%c0_1, %c0_2] : memref<8x32xf32, #tpu.memory_space<vmem>>, vector<8x32xf32>
    %c0_3 = arith.constant 0 : index
    %c0_4 = arith.constant 0 : index
    %2 = vector.load %arg3[%c0_3, %c0_4] : memref<1x32xf32, #tpu.memory_space<vmem>>, vector<1x32xf32>
    %3 = vector.broadcast %2 : vector<1x32xf32> to vector<8x32xf32>
    %4 = arith.mulf %1, %3 : vector<8x32xf32>
    %5 = arith.addf %0, %4 : vector<8x32xf32>
    %cst = arith.constant dense<0.000000e+00> : vector<8xf32>
    %6 = vector.multi_reduction <add>, %5, %cst [1] : vector<8x32xf32> to vector<8xf32>
    %7 = vector.shape_cast %6 : vector<8xf32> to vector<8x1xf32>
    %cst_5 = arith.constant 3.125000e-02 : f32
    %8 = vector.broadcast %cst_5 : f32 to vector<8x1xf32>
    %9 = arith.mulf %7, %8 : vector<8x1xf32>
    %10 = vector.broadcast %9 : vector<8x1xf32> to vector<8x32xf32>
    %11 = arith.subf %5, %10 : vector<8x32xf32>
    %12 = arith.mulf %11, %11 : vector<8x32xf32>
    %cst_6 = arith.constant dense<0.000000e+00> : vector<8xf32>
    %13 = vector.multi_reduction <add>, %12, %cst_6 [1] : vector<8x32xf32> to vector<8xf32>
    %14 = vector.shape_cast %13 : vector<8xf32> to vector<8x1xf32>
    %cst_7 = arith.constant 3.125000e-02 : f32
    %15 = vector.broadcast %cst_7 : f32 to vector<8x1xf32>
    %16 = arith.mulf %14, %15 : vector<8x1xf32>
    %cst_8 = arith.constant 9.99999974E-6 : f32
    %17 = vector.broadcast %cst_8 : f32 to vector<8x1xf32>
    %18 = arith.addf %16, %17 : vector<8x1xf32>
    %19 = math.rsqrt %18 : vector<8x1xf32>
    %20 = vector.broadcast %19 : vector<8x1xf32> to vector<8x32xf32>
    %21 = arith.mulf %11, %20 : vector<8x32xf32>
    %c0_9 = arith.constant 0 : index
    %c0_10 = arith.constant 0 : index
    %22 = vector.load %arg4[%c0_9, %c0_10] : memref<1x32xf32, #tpu.memory_space<vmem>>, vector<1x32xf32>
    %23 = vector.broadcast %22 : vector<1x32xf32> to vector<8x32xf32>
    %24 = arith.mulf %21, %23 : vector<8x32xf32>
    %c0_11 = arith.constant 0 : index
    %c0_12 = arith.constant 0 : index
    %25 = vector.load %arg5[%c0_11, %c0_12] : memref<1x32xf32, #tpu.memory_space<vmem>>, vector<1x32xf32>
    %26 = vector.broadcast %25 : vector<1x32xf32> to vector<8x32xf32>
    %27 = arith.addf %24, %26 : vector<8x32xf32>
    %c0_13 = arith.constant 0 : index
    %c0_14 = arith.constant 0 : index
    %28 = vector.load %arg6[%c0_13, %c0_14] : memref<8x32xf32, #tpu.memory_space<vmem>>, vector<8x32xf32>
    tpu.vector_store %arg6[%c0_13, %c0_14], %27 {strides = array<i32>} : memref<8x32xf32, #tpu.memory_space<vmem>>, vector<8x32xf32>,
    return
  }
  func.func @transform_0(%arg0: i32) -> (i32, i32) {
    %c0_i32 = arith.constant 0 : i32
    %c0_i32_0 = arith.constant 0 : i32
    return %arg0, %c0_i32 : i32, i32
  }
  func.func @transform_1(%arg0: i32) -> (i32, i32) {
    %c0_i32 = arith.constant 0 : i32
    %c0_i32_0 = arith.constant 0 : i32
    return %arg0, %c0_i32 : i32, i32
  }
  func.func @transform_2(%arg0: i32) -> (i32, i32) {
    %c0_i32 = arith.constant 0 : i32
    %c0_i32_0 = arith.constant 0 : i32
    %c0_i32_1 = arith.constant 0 : i32
    return %c0_i32, %c0_i32_0 : i32, i32
  }
  func.func @transform_3(%arg0: i32) -> (i32, i32) {
    %c0_i32 = arith.constant 0 : i32
    %c0_i32_0 = arith.constant 0 : i32
    %c0_i32_1 = arith.constant 0 : i32
    return %c0_i32, %c0_i32_0 : i32, i32
  }
  func.func @transform_4(%arg0: i32) -> (i32, i32) {
    %c0_i32 = arith.constant 0 : i32
    %c0_i32_0 = arith.constant 0 : i32
    %c0_i32_1 = arith.constant 0 : i32
    return %c0_i32, %c0_i32_0 : i32, i32
  }
  func.func @transform_5(%arg0: i32) -> (i32, i32) {
    %c0_i32 = arith.constant 0 : i32
    %c0_i32_0 = arith.constant 0 : i32
    return %arg0, %c0_i32 : i32, i32
  }
}

</mosaic_0001>

<llo_original>
// kernel: tpu_custom_call.1
$region0: #{tpu_custom_call.1}
  #allocation0 [shape = 'u32[]', space=smem, size = 0x4, offset = 0x4, fixed_abs, tag = 'smem constant byte address 0x4 - core index']
  #allocation1 [shape = 'u32[144,128]{1,0:T(1,128)}', space=vmem, size = 0x12000, scoped, tag = 'internal scratch']
  %s0 = inlined_call_operand.hbm [shape: f32[16,32], index: 0, kind: input, shape index: {}]
  %s1 = inlined_call_operand.hbm [shape: f32[16,32], index: 1, kind: input, shape index: {}]
  %s2 = inlined_call_operand.vmem [shape: f32[1,32], index: 2, kind: input, shape index: {}]
  %s3 = inlined_call_operand.vmem [shape: f32[1,32], index: 3, kind: input, shape index: {}]
  %s4 = inlined_call_operand.vmem [shape: f32[1,32], index: 4, kind: input, shape index: {}]
  %s5 = inlined_call_operand.hbm [shape: f32[16,32], index: 5, kind: output, shape index: {}]
  %s6 = sld [smem:[#allocation0]]
  $region61: #{tpu_custom_call.1} parent=0
    _
  %s8 = ssub.s32 1, %s6
  %s9 = scalar_select 0, %s8, %s6
  $region1: #{tpu_custom_call.1} parent=0
    #allocation2 [shape = 'u8[8192]{0}', space=vmem, size = 0x2000, scoped, tag = 'input window, operand 0']
    #allocation3 [shape = 's32[2]{0}', space=sflag, size = 0x8, scoped, tag = 'scoped memory for tpu_custom_call.1']
    #allocation4 [shape = 's32[2]{0}', space=sflag, size = 0x8, scoped, tag = 'scoped memory for tpu_custom_call.1']
    #allocation5 [shape = 'u8[8192]{0}', space=vmem, size = 0x2000, scoped, tag = 'input window, operand 1']
    #allocation6 [shape = 's32[2]{0}', space=sflag, size = 0x8, scoped, tag = 'scoped memory for tpu_custom_call.1']
    #allocation7 [shape = 'u8[8192]{0}', space=vmem, size = 0x2000, scoped, tag = 'output window, operand 0']
    %10 = vsyncpa [#allocation3], 0
    %s11 = scalar_lea.sflag [#allocation3], 1
    %12 = vsyncpa %s11, 0
    %13 = vsyncpa [#allocation6], 0
    %s14 = scalar_lea.sflag [#allocation6], 1
    %15 = vsyncpa %s14, 0
    %16 = vsyncpa [#allocation4], 0
    %s17 = scalar_lea.sflag [#allocation4], 1
    %18 = vsyncpa %s17, 0
    loop: start=0, step=1, limit=4
    $region2: #{tpu_custom_call.1} parent=1 // loop_pre_header
      _
    $region3: #{tpu_custom_call.1} parent=1 // loop_header
      %s20 = sphi 0, %s24
      %p21 = scmp.ge.s32.totalorder %s20, 4
      %s30 = sphi 0, %s32
      %s33 = sphi 0, %s30
      %s34 = sphi 0, %s33
      %s50 = sphi 0, %s34
      %s56 = sphi 0, %s58
      %s59 = sphi 0, %s56
      %s60 = sphi 0, %s59
      %s76 = sphi 0, %s60
      %s80 = sphi 0, %s80
      %s82 = sphi 0, %s80
      %s83 = sphi 0, %s82
      %s97 = sphi 0, %s83
      %s101 = sphi 0, %s101
      %s103 = sphi 0, %s101
      %s104 = sphi 0, %s103
      %s118 = sphi 0, %s104
      %s122 = sphi 0, %s122
      %s124 = sphi 0, %s122
      %s125 = sphi 0, %s124
      %s139 = sphi 0, %s125
      %s145 = sphi 0, %s147
      %s148 = sphi 0, %s145
      %s149 = sphi 0, %s148
      %s165 = sphi 0, %s149
    $region4: #{tpu_custom_call.1} parent=1 // loop_header_branch
      %23 = sbr.rel (%p21) target = $region8
    $region5: #{tpu_custom_call.1} parent=1 // loop_body
      %s25 = ssub.s32 %s20, 1
      %s26 = ssub.s32 %s20, 2
      %s27 = sadd.s32 %s20, 1
      %s28 = ssub.s32 %s20, %s27
      %p29 = scmp.eq.s32.totalorder %s28, 0
      %s31 = sadd.s32 %s30, 1
      %s32 = scalar_select %p29, %s30, %s31
      %p35 = pneg %p29
      %p36 = scmp.eq.s32.totalorder %s20, 1
      %p37 = por %p35, %p36
      %p38 = scmp.ne.s32.totalorder %s30, %s33
      %p39 = scmp.eq.s32.totalorder %s20, 0
      %p40 = por %p38, %p39
      %p41 = scmp.ne.s32.totalorder %s30, %s33
      %p42 = scmp.eq.s32.totalorder %s25, 1
      %p43 = por %p41, %p42
      %p44 = scmp.ne.s32.totalorder %s33, %s34
      %p45 = scmp.eq.s32.totalorder %s25, 0
      %p46 = por %p44, %p45
      %p47 = scmp.ne.s32.totalorder %s33, %s34
      %p48 = scmp.eq.s32.totalorder %s26, 1
      %p49 = por %p47, %p48
      %p51 = scmp.ne.s32.totalorder %s34, %s50
      %p52 = scmp.eq.s32.totalorder %s26, 0
      %p53 = por %p51, %p52
      %s54 = ssub.s32 %s20, %s27
      %p55 = scmp.eq.s32.totalorder %s54, 0
      %s57 = sadd.s32 %s56, 1
      %s58 = scalar_select %p55, %s56, %s57
      %p61 = pneg %p55
      %p62 = scmp.eq.s32.totalorder %s20, 1
      %p63 = por %p61, %p62
      %p64 = scmp.ne.s32.totalorder %s56, %s59
      %p65 = scmp.eq.s32.totalorder %s20, 0
      %p66 = por %p64, %p65
      %p67 = scmp.ne.s32.totalorder %s56, %s59
      %p68 = scmp.eq.s32.totalorder %s25, 1
      %p69 = por %p67, %p68
      %p70 = scmp.ne.s32.totalorder %s59, %s60
      %p71 = scmp.eq.s32.totalorder %s25, 0
      %p72 = por %p70, %p71
      %p73 = scmp.ne.s32.totalorder %s59, %s60
      %p74 = scmp.eq.s32.totalorder %s26, 1
      %p75 = por %p73, %p74
      %p77 = scmp.ne.s32.totalorder %s60, %s76
      %p78 = scmp.eq.s32.totalorder %s26, 0
      %p79 = por %p77, %p78
      %s81 = sadd.s32 %s80, 1
      %p84 = scmp.eq.s32.totalorder %s20, 1
      %p85 = scmp.ne.s32.totalorder %s80, %s82
      %p86 = scmp.eq.s32.totalorder %s20, 0
      %p87 = por %p85, %p86
      %p88 = scmp.ne.s32.totalorder %s80, %s82
      %p89 = scmp.eq.s32.totalorder %s25, 1
      %p90 = por %p88, %p89
      %p91 = scmp.ne.s32.totalorder %s82, %s83
      %p92 = scmp.eq.s32.totalorder %s25, 0
      %p93 = por %p91, %p92
      %p94 = scmp.ne.s32.totalorder %s82, %s83
      %p95 = scmp.eq.s32.totalorder %s26, 1
      %p96 = por %p94, %p95
      %p98 = scmp.ne.s32.totalorder %s83, %s97
      %p99 = scmp.eq.s32.totalorder %s26, 0
      %p100 = por %p98, %p99
      %s102 = sadd.s32 %s101, 1
      %p105 = scmp.eq.s32.totalorder %s20, 1
      %p106 = scmp.ne.s32.totalorder %s101, %s103
      %p107 = scmp.eq.s32.totalorder %s20, 0
      %p108 = por %p106, %p107
      %p109 = scmp.ne.s32.totalorder %s101, %s103
      %p110 = scmp.eq.s32.totalorder %s25, 1
      %p111 = por %p109, %p110
      %p112 = scmp.ne.s32.totalorder %s103, %s104
      %p113 = scmp.eq.s32.totalorder %s25, 0
      %p114 = por %p112, %p113
      %p115 = scmp.ne.s32.totalorder %s103, %s104
      %p116 = scmp.eq.s32.totalorder %s26, 1
      %p117 = por %p115, %p116
      %p119 = scmp.ne.s32.totalorder %s104, %s118
      %p120 = scmp.eq.s32.totalorder %s26, 0
      %p121 = por %p119, %p120
      %s123 = sadd.s32 %s122, 1
      %p126 = scmp.eq.s32.totalorder %s20, 1
      %p127 = scmp.ne.s32.totalorder %s122, %s124
      %p128 = scmp.eq.s32.totalorder %s20, 0
      %p129 = por %p127, %p128
      %p130 = scmp.ne.s32.totalorder %s122, %s124
      %p131 = scmp.eq.s32.totalorder %s25, 1
      %p132 = por %p130, %p131
      %p133 = scmp.ne.s32.totalorder %s124, %s125
      %p134 = scmp.eq.s32.totalorder %s25, 0
      %p135 = por %p133, %p134
      %p136 = scmp.ne.s32.totalorder %s124, %s125
      %p137 = scmp.eq.s32.totalorder %s26, 1
      %p138 = por %p136, %p137
      %p140 = scmp.ne.s32.totalorder %s125, %s139
      %p141 = scmp.eq.s32.totalorder %s26, 0
      %p142 = por %p140, %p141
      %s143 = ssub.s32 %s20, %s27
      %p144 = scmp.eq.s32.totalorder %s143, 0
      %s146 = sadd.s32 %s145, 1
      %s147 = scalar_select %p144, %s145, %s146
      %p150 = pneg %p144
      %p151 = scmp.eq.s32.totalorder %s20, 1
      %p152 = por %p150, %p151
      %p153 = scmp.ne.s32.totalorder %s145, %s148
      %p154 = scmp.eq.s32.totalorder %s20, 0
      %p155 = por %p153, %p154
      %p156 = scmp.ne.s32.totalorder %s145, %s148
      %p157 = scmp.eq.s32.totalorder %s25, 1
      %p158 = por %p156, %p157
      %p159 = scmp.ne.s32.totalorder %s148, %s149
      %p160 = scmp.eq.s32.totalorder %s25, 0
      %p161 = por %p159, %p160
      %p162 = scmp.ne.s32.totalorder %s148, %s149
      %p163 = scmp.eq.s32.totalorder %s26, 1
      %p164 = por %p162, %p163
      %p166 = scmp.ne.s32.totalorder %s149, %s165
      %p167 = scmp.eq.s32.totalorder %s26, 0
      %p168 = por %p166, %p167
      %p169 = scmp.le.s32.totalorder 1, %s20
      %p170 = scmp.lt.s32.totalorder %s20, 3
      %p171 = pnand %p169, %p170
      %p172 = pneg %p171
      // Predicated region
      $region9: #{tpu_custom_call.1} parent=5 // pred_check
        _
      $region10: #{tpu_custom_call.1} parent=5 // pred_check_branch
        %174 = sbr.rel (%p171) target = $region12
      $region11: #{tpu_custom_call.1} parent=5 // pred_region
        %s175 = ssub.s32 %s20, 1
        // Predicated region
        $region13: #{tpu_custom_call.1} parent=11 // pred_check
          %p176 = pneg %p93
        $region14: #{tpu_custom_call.1} parent=11 // pred_check_branch
          %178 = sbr.rel (%p176) target = $region16
        $region15: #{tpu_custom_call.1} parent=11 // pred_region
          _
        $region16: #{tpu_custom_call.1} parent=11 // pred_fallthru
          _
        // Predicated region
        $region17: #{tpu_custom_call.1} parent=11 // pred_check
          %p179 = pneg %p114
        $region18: #{tpu_custom_call.1} parent=11 // pred_check_branch
          %181 = sbr.rel (%p179) target = $region20
        $region19: #{tpu_custom_call.1} parent=11 // pred_region
          _
        $region20: #{tpu_custom_call.1} parent=11 // pred_fallthru
          _
        // Predicated region
        $region21: #{tpu_custom_call.1} parent=11 // pred_check
          %p182 = pneg %p135
        $region22: #{tpu_custom_call.1} parent=11 // pred_check_branch
          %184 = sbr.rel (%p182) target = $region24
        $region23: #{tpu_custom_call.1} parent=11 // pred_region
          _
        $region24: #{tpu_custom_call.1} parent=11 // pred_fallthru
          _
      $region12: #{tpu_custom_call.1} parent=5 // pred_fallthru
        _
      %p185 = scmp.lt.s32.totalorder %s20, 2
      // Predicated region
      $region25: #{tpu_custom_call.1} parent=5 // pred_check
        %p186 = pneg %p185
      $region26: #{tpu_custom_call.1} parent=5 // pred_check_branch
        %188 = sbr.rel (%p186) target = $region28
      $region27: #{tpu_custom_call.1} parent=5 // pred_region
        // Predicated region
        $region29: #{tpu_custom_call.1} parent=27 // pred_check
          %p189 = pneg %p40
        $region30: #{tpu_custom_call.1} parent=27 // pred_check_branch
          %191 = sbr.rel (%p189) target = $region32
        $region31: #{tpu_custom_call.1} parent=27 // pred_region
          %s192 = sand.u32 %s30, 1
          %s193 = scalar_lea.sflag [#allocation3], %s192
          %s194 = sand.u32 %s30, 1
          %s195 = smul.addr %s194, 8
          %s196 = scalar_lea.vmem [#allocation2], %s195
          %s198 = ssub.s32 128, 128
          %199 = vsyncadd %s193, %s198
          %s200 = smul.addr %s20, 128
          %s201 = scalar_lea.hbm %s0, %s200
          %s203 = sshll.u32 %s196, 4
          %s204 = int_to_ptr.vmem [resolvable:$true] %s203
          %206 = dma.hbm_to_vmem [thread:$0]  %s201, 128, %s204, %s193
        $region32: #{tpu_custom_call.1} parent=27 // pred_fallthru
          _
        // Predicated region
        $region33: #{tpu_custom_call.1} parent=27 // pred_check
          %p207 = pneg %p66
        $region34: #{tpu_custom_call.1} parent=27 // pred_check_branch
          %209 = sbr.rel (%p207) target = $region36
        $region35: #{tpu_custom_call.1} parent=27 // pred_region
          %s210 = sand.u32 %s56, 1
          %s211 = scalar_lea.sflag [#allocation6], %s210
          %s212 = sand.u32 %s56, 1
          %s213 = smul.addr %s212, 8
          %s214 = scalar_lea.vmem [#allocation5], %s213
          %s216 = ssub.s32 128, 128
          %217 = vsyncadd %s211, %s216
          %s218 = smul.addr %s20, 128
          %s219 = scalar_lea.hbm %s1, %s218
          %s221 = sshll.u32 %s214, 4
          %s222 = int_to_ptr.vmem [resolvable:$true] %s221
          %224 = dma.hbm_to_vmem [thread:$0]  %s219, 128, %s222, %s211
        $region36: #{tpu_custom_call.1} parent=27 // pred_fallthru
          _
      $region28: #{tpu_custom_call.1} parent=5 // pred_fallthru
        _
      %p225 = scmp.le.s32.totalorder 1, %s20
      %p226 = scmp.lt.s32.totalorder %s20, 3
      %p227 = pnand %p225, %p226
      %p228 = pneg %p227
      // Predicated region
      $region37: #{tpu_custom_call.1} parent=5 // pred_check
        _
      $region38: #{tpu_custom_call.1} parent=5 // pred_check_branch
        %230 = sbr.rel (%p227) target = $region40
      $region39: #{tpu_custom_call.1} parent=5 // pred_region
        %s231 = ssub.s32 %s20, 1
        %s232 = sand.u32 %s33, 1
        %s233 = scalar_lea.sflag [#allocation3], %s232
        %s234 = sand.u32 %s33, 1
        %s235 = smul.addr %s234, 8
        %s236 = scalar_lea.vmem [#allocation2], %s235
        // Predicated region
        $region41: #{tpu_custom_call.1} parent=39 // pred_check
          %p237 = pneg %p46
        $region42: #{tpu_custom_call.1} parent=39 // pred_check_branch
          %239 = sbr.rel (%p237) target = $region44
        $region43: #{tpu_custom_call.1} parent=39 // pred_region
          %240 = dma.done %s233, 128
        $region44: #{tpu_custom_call.1} parent=39 // pred_fallthru
          _
        %s241 = sand.u32 %s59, 1
        %s242 = scalar_lea.sflag [#allocation6], %s241
        %s243 = sand.u32 %s59, 1
        %s244 = smul.addr %s243, 8
        %s245 = scalar_lea.vmem [#allocation5], %s244
        // Predicated region
        $region45: #{tpu_custom_call.1} parent=39 // pred_check
          %p246 = pneg %p72
        $region46: #{tpu_custom_call.1} parent=39 // pred_check_branch
          %248 = sbr.rel (%p246) target = $region48
        $region47: #{tpu_custom_call.1} parent=39 // pred_region
          %249 = dma.done %s242, 128
        $region48: #{tpu_custom_call.1} parent=39 // pred_fallthru
          _
        %s250 = sand.u32 %s33, 1
        %s251 = scalar_lea.sflag [#allocation3], %s250
        %s252 = sand.u32 %s33, 1
        %s253 = smul.addr %s252, 8
        %s254 = scalar_lea.vmem [#allocation2], %s253
        %p255 = pneg %p46
        %p256 = pneg %p43
        %s257 = sand.u32 %s59, 1
        %s258 = scalar_lea.sflag [#allocation6], %s257
        %s259 = sand.u32 %s59, 1
        %s260 = smul.addr %s259, 8
        %s261 = scalar_lea.vmem [#allocation5], %s260
        %p262 = pneg %p72
        %p263 = pneg %p69
        %p264 = pneg %p93
        %p265 = pneg %p90
        %p266 = pneg %p114
        %p267 = pneg %p111
        %p268 = pneg %p135
        %p269 = pneg %p132
        %p270 = pneg %p161
        %p271 = pneg %p158
        %s272 = sand.u32 %s148, 1
        %s273 = scalar_lea.sflag [#allocation4], %s272
        %s274 = sand.u32 %s148, 1
        %s275 = smul.addr %s274, 8
        %s276 = scalar_lea.vmem [#allocation7], %s275
        %v277 = vld [vmem:[%s236] sm:$0xff]
        %v278 = vld [vmem:[%s245] sm:$0xff]
        %v279 = vld [vmem:[%s2] sm:$0x1]
        %v281 = vlaneseq
        %v282 = vshrl.u32 %v281, 7
        %v283 = vsub.s32 0, %v282
        %v284 = vrot.slane %v279, %v283
        %v286 = vmul.f32 %v278, %v284
        %v287 = vadd.f32 %v277, %v286
        %vm288 = vcmask 261120
        %v289 = vsel %vm288, %v287, 0.0
        %290 = vadd.xlane.f32.xlu0 %v289
        %v291 = vpop.xlane.xlu0 %290
        %v292 = vmul.f32 %v291, 0.03125
        %v293 = vsub.f32 %v287, %v292
        %v294 = vmul.f32 %v293, %v293
        %v295 = vsel %vm288, %v294, 0.0
        %296 = vadd.xlane.f32.xlu0 %v295
        %v297 = vpop.xlane.xlu0 %296
        %v298 = vmul.f32 %v297, 0.03125
        %v299 = vadd.f32 %v298, 1e-05
        %v300 = vrsqrt.pop %v299
        %v301 = vmul.f32 %v293, %v300
        %v302 = vld [vmem:[%s3] sm:$0x1]
        %v304 = vlaneseq
        %v305 = vshrl.u32 %v304, 7
        %v306 = vsub.s32 0, %v305
        %v307 = vrot.slane %v302, %v306
        %v309 = vmul.f32 %v301, %v307
        %v310 = vld [vmem:[%s4] sm:$0x1]
        %v312 = vlaneseq
        %v313 = vshrl.u32 %v312, 7
        %v314 = vsub.s32 0, %v313
        %v315 = vrot.slane %v310, %v314
        %v317 = vadd.f32 %v309, %v315
        %318 = vst.msk [vmem:[%s276] sm:$0xff] %vm288, %v317
        %s319 = sand.u32 %s148, 1
        %s320 = scalar_lea.sflag [#allocation4], %s319
        %s321 = sand.u32 %s148, 1
        %s322 = smul.addr %s321, 8
        %s323 = scalar_lea.vmem [#allocation7], %s322
        // Predicated region
        $region49: #{tpu_custom_call.1} parent=39 // pred_check
          %p324 = pneg %p158
        $region50: #{tpu_custom_call.1} parent=39 // pred_check_branch
          %326 = sbr.rel (%p324) target = $region52
        $region51: #{tpu_custom_call.1} parent=39 // pred_region
          %s328 = ssub.s32 128, 128
          %329 = vsyncadd %s320, %s328
          %s330 = smul.addr %s25, 128
          %s331 = scalar_lea.hbm %s5, %s330
          %s333 = sshll.u32 %s323, 4
          %s334 = int_to_ptr.vmem [resolvable:$true] %s333
          %336 = dma.vmem_to_hbm [thread:$0]  %s334, 128, %s331, %s320
        $region52: #{tpu_custom_call.1} parent=39 // pred_fallthru
          _
      $region40: #{tpu_custom_call.1} parent=5 // pred_fallthru
        _
      %p337 = scmp.le.s32.totalorder 2, %s20
      // Predicated region
      $region53: #{tpu_custom_call.1} parent=5 // pred_check
        %p338 = pneg %p337
      $region54: #{tpu_custom_call.1} parent=5 // pred_check_branch
        %340 = sbr.rel (%p338) target = $region56
      $region55: #{tpu_custom_call.1} parent=5 // pred_region
        %s341 = ssub.s32 %s20, 2
        // Predicated region
        $region57: #{tpu_custom_call.1} parent=55 // pred_check
          %p342 = pneg %p164
        $region58: #{tpu_custom_call.1} parent=55 // pred_check_branch
          %344 = sbr.rel (%p342) target = $region60
        $region59: #{tpu_custom_call.1} parent=55 // pred_region
          %s345 = sand.u32 %s149, 1
          %s346 = scalar_lea.sflag [#allocation4], %s345
          %s347 = sand.u32 %s149, 1
          %s348 = smul.addr %s347, 8
          %s349 = scalar_lea.vmem [#allocation7], %s348
          %350 = dma.done %s346, 128
        $region60: #{tpu_custom_call.1} parent=55 // pred_fallthru
          _
      $region56: #{tpu_custom_call.1} parent=5 // pred_fallthru
        _
    $region6: #{tpu_custom_call.1} parent=1 // loop_footer
      %s24 = sadd.s32 1, %s20
    $region7: #{tpu_custom_call.1} parent=1 // loop_footer_branch
      %19 = sbr.rel target = $region3
    $region8: #{tpu_custom_call.1} parent=1 // loop_exit
      _
    %351 = vsyncpa [#allocation3], 1
    %s352 = scalar_lea.sflag [#allocation3], 1
    %353 = vsyncpa %s352, 1
    %354 = vsyncpa [#allocation6], 1
    %s355 = scalar_lea.sflag [#allocation6], 1
    %356 = vsyncpa %s355, 1
    %357 = vsyncpa [#allocation4], 1
    %s358 = scalar_lea.sflag [#allocation4], 1
    %359 = vsyncpa %s358, 1

</llo_original>
